<compile_context>
chip_gen: v7x
topology: tpu7x:2x2x1
jax: 0.10.0
libtpu: 0.0.40
codegen_flags: <defaults>
</compile_context>

<pallas_src>
import functools

import jax
import jax.numpy as jnp
from jax.experimental import pallas as pl
from jax.experimental.pallas import tpu as pltpu


def _round_up(x, m):
    return (x + m - 1) // m * m


def _conv_pool_kernel(patches_ref, wconv_ref, bconv_ref, o_ref, acc_ref,
                      *, hw, tile_m, inv_hw, needs_mask):
    """Grid = (image n [parallel], per-image M-tile m [arbitrary, reduction]).

    patches_ref: (tile_m, K)  bf16  im2col rows of image n, tile m (K = 27, un-padded)
    wconv_ref  : (K, CP)      bf16  conv weight (Cout zero-padded to CP lanes)
    bconv_ref  : (1, CP)      f32   conv bias   (zero padded)
    o_ref      : (1, CP)      f32   pooled features for image n (leading dim squeezed)
    acc_ref    : (8, CP)      f32   per-image channel-sum accumulator (VMEM scratch)
    """
    m = pl.program_id(1)

    @pl.when(m == 0)
    def _():
        acc_ref[...] = jnp.zeros_like(acc_ref)

    # conv-as-matmul on the MXU: bf16 x bf16 -> f32 accumulate (contraction depth K=27).
    conv = jnp.dot(patches_ref[...], wconv_ref[...],
                   preferred_element_type=jnp.float32)
    conv = jnp.maximum(conv + bconv_ref[...], 0.0)          # bias + ReLU in f32

    if needs_mask:
        # Ragged tail: zero out rows past the real feature-map size so bias+ReLU of the
        # zero-padded im2col rows does not leak into the pooled sum.
        row = m * tile_m + jax.lax.broadcasted_iota(jnp.int32, conv.shape, 0)
        conv = jnp.where(row < hw, conv, 0.0)

    # Partial global-average-pool: shallow per-step reduce into an 8-sublane accumulator.
    acc_ref[...] += jnp.sum(conv.reshape(tile_m // 8, 8, conv.shape[-1]), axis=0)

    @pl.when(m == pl.num_programs(1) - 1)
    def _():
        pooled = jnp.sum(acc_ref[...], axis=0, keepdims=True) * inv_hw   # (1, CP)
        o_ref[...] = pooled.astype(o_ref.dtype)


@functools.partial(jax.jit, static_argnames=("tile_m",))
def encoder_cnn_forward(images_nchw, conv_w, conv_b, head_w, head_b, *, tile_m=None):
    """images_nchw: (N, Cin, H, W) f32 (PyTorch layout).
    conv_w: (3, 3, Cin, Cout), conv_b: (Cout,)
    head_w: (Cout, num_classes), head_b: (num_classes,)
    Returns (N, num_classes) f32 logits.
    """
    # NCHW -> NHWC glue.
    x = jnp.transpose(images_nchw, (0, 2, 3, 1))
    N, H, W, Cin = x.shape
    KH, KW, _, Cout = conv_w.shape
    num_classes = head_w.shape[-1]
    HW = H * W

    K = KH * KW * Cin                   # im2col contraction depth (27) — NOT lane padded
    CP = _round_up(Cout, 128)           # lane-dense conv output channels

    # --- M-tile selection: multiple of 16 (bf16 sublane packing), cdiv grid + masked tail ---
    if tile_m is None:
        tile_m = min(_round_up(HW, 16), 4096)
    tile_m = max(16, _round_up(int(tile_m), 16))
    tiles_per_img = -(-HW // tile_m)            # cdiv
    hw_pad = tiles_per_img * tile_m
    needs_mask = hw_pad != HW

    # --- im2col (materialized HBM input at width K; ~9x image bytes at bf16, was ~42x) ---
    ph, pw = KH // 2, KW // 2
    xp = jnp.pad(x, ((0, 0), (ph, ph), (pw, pw), (0, 0)))
    taps = [xp[:, i:i + H, j:j + W, :] for i in range(KH) for j in range(KW)]
    patches = jnp.concatenate(taps, axis=-1).reshape(N, HW, K)
    if needs_mask:
        patches = jnp.pad(patches, ((0, 0), (0, hw_pad - HW), (0, 0)))
    patches = patches.reshape(N * hw_pad, K).astype(jnp.bfloat16)

    # --- conv parameters (only the Cout axis is lane-padded; K stays exact) ---
    w2d = conv_w.reshape(K, Cout)
    w2d = jnp.pad(w2d, ((0, 0), (0, CP - Cout))).astype(jnp.bfloat16)
    b2d = jnp.pad(conv_b, (0, CP - Cout)).reshape(1, CP).astype(jnp.float32)

    kernel = functools.partial(_conv_pool_kernel, hw=HW, tile_m=tile_m,
                               inv_hw=1.0 / HW, needs_mask=needs_mask)

    pooled_padded = pl.pallas_call(
        kernel,
        out_shape=jax.ShapeDtypeStruct((N, 1, CP), jnp.float32),
        grid=(N, tiles_per_img),
        in_specs=[
            # im2col rows of image n, tile m (bf16; last dim == full array dim K)
            pl.BlockSpec((tile_m, K), lambda n, m: (n * tiles_per_img + m, 0)),
            pl.BlockSpec((K, CP), lambda n, m: (0, 0)),      # conv weight (resident)
            pl.BlockSpec((1, CP), lambda n, m: (0, 0)),      # conv bias   (resident)
        ],
        out_specs=pl.BlockSpec((None, 1, CP), lambda n, m: (n, 0, 0)),
        scratch_shapes=[pltpu.VMEM((8, CP), jnp.float32)],
        compiler_params=pltpu.CompilerParams(
            dimension_semantics=("parallel", "arbitrary")),
        cost_estimate=pl.CostEstimate(
            flops=2 * N * hw_pad * K * Cout,
            transcendentals=0,
            bytes_accessed=(N * hw_pad * K + K * CP) * 2      # bf16 streams
                           + (CP + N * CP) * 4),               # f32 bias + pooled out
    )(patches, w2d, b2d)

    pooled = pooled_padded[:, 0, :Cout]                        # (N, Cout) f32
    # Linear head (the module's `last_layer`) as one batched f32 matmul in XLA.
    return pooled @ head_w + head_b


if __name__ == "__main__":
    key = jax.random.PRNGKey(0)
    k1, k2, k3, k4, k5 = jax.random.split(key, 5)

    # Small shapes consistent with the forward: NCHW images, Linear head.
    N, Cin, H, W = 2, 3, 16, 16
    Cout, num_classes = 32, 4

    images = jax.random.normal(k1, (N, Cin, H, W), jnp.float32)
    # Deterministic synthetic parameters (the module __init__ only defines the Linear
    # head; the conv stem stands in for the frozen pretrained base_model).
    conv_w = 0.1 * jax.random.normal(k2, (3, 3, Cin, Cout), jnp.float32)
    conv_b = 0.01 * jax.random.normal(k3, (Cout,), jnp.float32)
    head_w = 0.1 * jax.random.normal(k4, (Cout, num_classes), jnp.float32)
    head_b = 0.01 * jax.random.normal(k5, (num_classes,), jnp.float32)

    # Plain-JAX reference of the same synthetic model (bf16 MXU operands, f32 accumulate —
    # matching the kernel's numerics).
    x_nhwc = jnp.transpose(images, (0, 2, 3, 1))
    ref = jax.lax.conv_general_dilated(
        x_nhwc.astype(jnp.bfloat16), conv_w.astype(jnp.bfloat16),
        window_strides=(1, 1), padding="SAME",
        dimension_numbers=("NHWC", "HWIO", "NHWC"),
        preferred_element_type=jnp.float32) + conv_b
    ref = jnp.maximum(ref, 0.0).mean(axis=(1, 2)) @ head_w + head_b

    # Config 1: tile_m=64 divides HW=256 -> 4 reduction steps/image, no tail mask.
    out = encoder_cnn_forward(images, conv_w, conv_b, head_w, head_b, tile_m=64)
    out = jax.block_until_ready(out)
    assert out.shape == (N, num_classes) and out.dtype == jnp.float32
    err = jnp.max(jnp.abs(out - ref))
    assert jnp.allclose(out, ref, atol=5e-3, rtol=5e-3), err

    # Config 2: tile_m=48 does NOT divide HW=256 -> cdiv grid + masked ragged tail.
    out2 = encoder_cnn_forward(images, conv_w, conv_b, head_w, head_b, tile_m=48)
    out2 = jax.block_until_ready(out2)
    err2 = jnp.max(jnp.abs(out2 - ref))
    assert jnp.allclose(out2, ref, atol=5e-3, rtol=5e-3), err2

    print("KERNEL_OK")
</pallas_src>

<mosaic_0001>
module attributes {stable_mosaic.version = 11 : i64} {
  func.func @_conv_pool_kernel(%arg0: i32, %arg1: i32, %arg2: memref<64x27xbf16, #tpu.memory_space<vmem>>, %arg3: memref<27x128xbf16, #tpu.memory_space<vmem>>, %arg4: memref<1x128xf32, #tpu.memory_space<vmem>>, %arg5: memref<1x1x128xf32, #tpu.memory_space<vmem>>, %arg6: memref<8x128xf32, #tpu.memory_space<vmem>>) attributes {dimension_semantics = [#tpu.dimension_semantics<parallel>, #tpu.dimension_semantics<arbitrary>], iteration_bounds = array<i64: 2, 4>, scalar_prefetch = 0 : i64, scratch_operands = 1 : i64, tpu.core_type = #tpu.core_type<tc>, window_params = [{transform_indices = @transform_0, window_bounds = array<i64: 64, 27>}, {pipeline_mode = #tpu.pipeline_mode<synchronous>, transform_indices = @transform_1, window_bounds = array<i64: 27, 128>}, {pipeline_mode = #tpu.pipeline_mode<synchronous>, transform_indices = @transform_2, window_bounds = array<i64: 1, 128>}, {transform_indices = @transform_3, window_bounds = array<i64: 1, 1, 128>}]} {
    %c0_i32 = arith.constant 0 : i32
    %0 = arith.cmpi eq, %arg1, %c0_i32 : i32
    %1 = arith.extui %0 : i1 to i32
    %c0_i32_0 = arith.constant 0 : i32
    %2 = arith.cmpi ne, %1, %c0_i32_0 : i32
    scf.if %2 {
      %cst_13 = arith.constant 0.000000e+00 : f32
      %19 = vector.broadcast %cst_13 : f32 to vector<8x128xf32>
      %c0_14 = arith.constant 0 : index
      %c0_15 = arith.constant 0 : index
      %20 = vector.load %arg6[%c0_14, %c0_15] : memref<8x128xf32, #tpu.memory_space<vmem>>, vector<8x128xf32>
      tpu.vector_store %arg6[%c0_14, %c0_15], %19 {strides = array<i32>} : memref<8x128xf32, #tpu.memory_space<vmem>>, vector<8x128xf32>,
    } else {
    }
    %c0 = arith.constant 0 : index
    %c0_1 = arith.constant 0 : index
    %3 = vector.load %arg2[%c0, %c0_1] : memref<64x27xbf16, #tpu.memory_space<vmem>>, vector<64x27xbf16>
    %c0_2 = arith.constant 0 : index
    %c0_3 = arith.constant 0 : index
    %4 = vector.load %arg3[%c0_2, %c0_3] : memref<27x128xbf16, #tpu.memory_space<vmem>>, vector<27x128xbf16>
    %cst = arith.constant dense<0.000000e+00> : vector<64x128xf32>
    %5 = tpu.matmul %3, %4, %cst {dimension_numbers = #tpu.dot_dimension_numbers<[1], [0], [0], [1], [0, 0, 1, 1], [], []>} : vector<64x27xbf16>, vector<27x128xbf16>, vector<64x128xf32> -> vector<64x128xf32>
    %c0_4 = arith.constant 0 : index
    %c0_5 = arith.constant 0 : index
    %6 = vector.load %arg4[%c0_4, %c0_5] : memref<1x128xf32, #tpu.memory_space<vmem>>, vector<1x128xf32>
    %7 = vector.broadcast %6 : vector<1x128xf32> to vector<64x128xf32>
    %8 = arith.addf %5, %7 : vector<64x128xf32>
    %cst_6 = arith.constant 0.000000e+00 : f32
    %9 = vector.broadcast %cst_6 : f32 to vector<64x128xf32>
    %10 = arith.maximumf %8, %9 : vector<64x128xf32>
    %c0_7 = arith.constant 0 : index
    %c0_8 = arith.constant 0 : index
    %11 = vector.load %arg6[%c0_7, %c0_8] : memref<8x128xf32, #tpu.memory_space<vmem>>, vector<8x128xf32>
    %12 = vector.shape_cast %10 : vector<64x128xf32> to vector<8x8x128xf32>
    %cst_9 = arith.constant dense<0.000000e+00> : vector<8x128xf32>
    %13 = vector.multi_reduction <add>, %12, %cst_9 [0] : vector<8x8x128xf32> to vector<8x128xf32>
    %14 = arith.addf %11, %13 : vector<8x128xf32>
    %c0_10 = arith.constant 0 : index
    %c0_11 = arith.constant 0 : index
    %15 = vector.load %arg6[%c0_10, %c0_11] : memref<8x128xf32, #tpu.memory_space<vmem>>, vector<8x128xf32>
    tpu.vector_store %arg6[%c0_10, %c0_11], %14 {strides = array<i32>} : memref<8x128xf32, #tpu.memory_space<vmem>>, vector<8x128xf32>,
    %c3_i32 = arith.constant 3 : i32
    %16 = arith.cmpi eq, %arg1, %c3_i32 : i32
    %17 = arith.extui %16 : i1 to i32
    %c0_i32_12 = arith.constant 0 : i32
    %18 = arith.cmpi ne, %17, %c0_i32_12 : i32
    scf.if %18 {
      %c0_13 = arith.constant 0 : index
      %c0_14 = arith.constant 0 : index
      %19 = vector.load %arg6[%c0_13, %c0_14] : memref<8x128xf32, #tpu.memory_space<vmem>>, vector<8x128xf32>
      %cst_15 = arith.constant dense<0.000000e+00> : vector<128xf32>
      %20 = vector.multi_reduction <add>, %19, %cst_15 [0] : vector<8x128xf32> to vector<128xf32>
      %21 = vector.shape_cast %20 : vector<128xf32> to vector<1x128xf32>
      %cst_16 = arith.constant 3.906250e-03 : f32
      %22 = vector.broadcast %cst_16 : f32 to vector<1x128xf32>
      %23 = arith.mulf %21, %22 : vector<1x128xf32>
      %c0_17 = arith.constant 0 : index
      %c0_18 = arith.constant 0 : index
      %c0_19 = arith.constant 0 : index
      %24 = vector.load %arg5[%c0_17, %c0_18, %c0_19] : memref<1x1x128xf32, #tpu.memory_space<vmem>>, vector<1x1x128xf32>
      %25 = vector.shape_cast %24 : vector<1x1x128xf32> to vector<1x128xf32>
      %26 = vector.shape_cast %23 : vector<1x128xf32> to vector<1x1x128xf32>
      tpu.vector_store %arg5[%c0_17, %c0_18, %c0_19], %26 {strides = array<i32>} : memref<1x1x128xf32, #tpu.memory_space<vmem>>, vector<1x1x128xf32>,
    } else {
    }
    return
  }
  func.func @transform_0(%arg0: i32, %arg1: i32) -> (i32, i32) {
    %c4_i32 = arith.constant 4 : i32
    %0 = arith.muli %arg0, %c4_i32 : i32
    %1 = arith.addi %0, %arg1 : i32
    %c0_i32 = arith.constant 0 : i32
    %c0_i32_0 = arith.constant 0 : i32
    return %1, %c0_i32 : i32, i32
  }
  func.func @transform_1(%arg0: i32, %arg1: i32) -> (i32, i32) {
    %c0_i32 = arith.constant 0 : i32
    %c0_i32_0 = arith.constant 0 : i32
    %c0_i32_1 = arith.constant 0 : i32
    return %c0_i32, %c0_i32_0 : i32, i32
  }
  func.func @transform_2(%arg0: i32, %arg1: i32) -> (i32, i32) {
    %c0_i32 = arith.constant 0 : i32
    %c0_i32_0 = arith.constant 0 : i32
    %c0_i32_1 = arith.constant 0 : i32
    return %c0_i32, %c0_i32_0 : i32, i32
  }
  func.func @transform_3(%arg0: i32, %arg1: i32) -> (i32, i32, i32) {
    %c0_i32 = arith.constant 0 : i32
    %c0_i32_0 = arith.constant 0 : i32
    %c0_i32_1 = arith.constant 0 : i32
    return %arg0, %c0_i32, %c0_i32_0 : i32, i32, i32
  }
}

</mosaic_0001>

<llo_original>
// kernel: encoder_cnn_forward.1
$region0: #{encoder_cnn_forward.1}
  #allocation0 [shape = 'u32[]', space=smem, size = 0x4, offset = 0x4, fixed_abs, tag = 'smem constant byte address 0x4 - core index']
  #allocation1 [shape = 'u32[144,128]{1,0:T(1,128)}', space=vmem, size = 0x12000, scoped, tag = 'internal scratch']
  #allocation2 [shape = 'f32[8,128]{1,0:T(8,128)}', space=vmem, size = 0x1000, scoped, tag = 'scratch operand']
  %s0 = inlined_call_operand.vmem [shape: bf16[512,27], index: 0, kind: input, shape index: {}]
  %s1 = inlined_call_operand.vmem [shape: bf16[27,128], index: 1, kind: input, shape index: {}]
  %s2 = inlined_call_operand.vmem [shape: f32[1,128], index: 2, kind: input, shape index: {}]
  %s3 = inlined_call_operand.vmem [shape: f32[2,1,128], index: 3, kind: output, shape index: {}]
  %s4 = sld [smem:[#allocation0]]
  $region53: #{encoder_cnn_forward.1} parent=0
    _
  %s6 = ssub.s32 1, %s4
  %s7 = scalar_select 0, %s6, %s4
  loop: start=0, step=1, limit=10
  $region2: #{encoder_cnn_forward.1} parent=0 // loop_pre_header
    _
  $region3: #{encoder_cnn_forward.1} parent=0 // loop_header
    %s9 = sphi 0, %s13
    %p10 = scmp.ge.s32.totalorder %s9, 10
    %s16 = sphi 0, %s28
    %s17 = sphi 0, %s24
    %s18 = sphi 0, %s16
    %s19 = sphi 0, %s17
    %s20 = sphi 0, %s18
    %s21 = sphi 0, %s19
    %s35 = sphi 0, %s37
    %s38 = sphi 0, %s35
    %s39 = sphi 0, %s38
    %s55 = sphi 0, %s39
    %s59 = sphi 0, %s59
    %s61 = sphi 0, %s59
    %s62 = sphi 0, %s61
    %s76 = sphi 0, %s62
    %s80 = sphi 0, %s80
    %s82 = sphi 0, %s80
    %s83 = sphi 0, %s82
    %s97 = sphi 0, %s83
    %s103 = sphi 0, %s105
    %s106 = sphi 0, %s103
    %s107 = sphi 0, %s106
    %s123 = sphi 0, %s107
  $region4: #{encoder_cnn_forward.1} parent=0 // loop_header_branch
    %12 = sbr.rel (%p10) target = $region8
  $region5: #{encoder_cnn_forward.1} parent=0 // loop_body
    %s14 = ssub.s32 %s9, 1
    %s15 = ssub.s32 %s9, 2
    %s22 = sadd.s32 1, %s17
    %p23 = scmp.ge.s32.totalorder %s22, 4
    %s24 = scalar_select %p23, 0, %s22
    %s25 = sadd.s32 1, %s16
    %s26 = scalar_select %p23, %s25, %s16
    %p27 = scmp.ge.s32.totalorder %s26, 2
    %s28 = scalar_select %p27, 0, %s26
    %s29 = smul.u32 %s16, 4
    %s30 = sadd.s32 %s29, %s17
    %s31 = smul.u32 %s28, 4
    %s32 = sadd.s32 %s31, %s24
    %s33 = ssub.s32 %s30, %s32
    %p34 = scmp.eq.s32.totalorder %s33, 0
    %s36 = sadd.s32 %s35, 1
    %s37 = scalar_select %p34, %s35, %s36
    %p40 = pneg %p34
    %p41 = scmp.eq.s32.totalorder %s9, 7
    %p42 = por %p40, %p41
    %p43 = scmp.ne.s32.totalorder %s35, %s38
    %p44 = scmp.eq.s32.totalorder %s9, 0
    %p45 = por %p43, %p44
    %p46 = scmp.ne.s32.totalorder %s35, %s38
    %p47 = scmp.eq.s32.totalorder %s14, 7
    %p48 = por %p46, %p47
    %p49 = scmp.ne.s32.totalorder %s38, %s39
    %p50 = scmp.eq.s32.totalorder %s14, 0
    %p51 = por %p49, %p50
    %p52 = scmp.ne.s32.totalorder %s38, %s39
    %p53 = scmp.eq.s32.totalorder %s15, 7
    %p54 = por %p52, %p53
    %p56 = scmp.ne.s32.totalorder %s39, %s55
    %p57 = scmp.eq.s32.totalorder %s15, 0
    %p58 = por %p56, %p57
    %s60 = sadd.s32 %s59, 1
    %p63 = scmp.eq.s32.totalorder %s9, 7
    %p64 = scmp.ne.s32.totalorder %s59, %s61
    %p65 = scmp.eq.s32.totalorder %s9, 0
    %p66 = por %p64, %p65
    %p67 = scmp.ne.s32.totalorder %s59, %s61
    %p68 = scmp.eq.s32.totalorder %s14, 7
    %p69 = por %p67, %p68
    %p70 = scmp.ne.s32.totalorder %s61, %s62
    %p71 = scmp.eq.s32.totalorder %s14, 0
    %p72 = por %p70, %p71
    %p73 = scmp.ne.s32.totalorder %s61, %s62
    %p74 = scmp.eq.s32.totalorder %s15, 7
    %p75 = por %p73, %p74
    %p77 = scmp.ne.s32.totalorder %s62, %s76
    %p78 = scmp.eq.s32.totalorder %s15, 0
    %p79 = por %p77, %p78
    %s81 = sadd.s32 %s80, 1
    %p84 = scmp.eq.s32.totalorder %s9, 7
    %p85 = scmp.ne.s32.totalorder %s80, %s82
    %p86 = scmp.eq.s32.totalorder %s9, 0
    %p87 = por %p85, %p86
    %p88 = scmp.ne.s32.totalorder %s80, %s82
    %p89 = scmp.eq.s32.totalorder %s14, 7
    %p90 = por %p88, %p89
    %p91 = scmp.ne.s32.totalorder %s82, %s83
    %p92 = scmp.eq.s32.totalorder %s14, 0
    %p93 = por %p91, %p92
    %p94 = scmp.ne.s32.totalorder %s82, %s83
    %p95 = scmp.eq.s32.totalorder %s15, 7
    %p96 = por %p94, %p95
    %p98 = scmp.ne.s32.totalorder %s83, %s97
    %p99 = scmp.eq.s32.totalorder %s15, 0
    %p100 = por %p98, %p99
    %s101 = ssub.s32 %s16, %s28
    %p102 = scmp.eq.s32.totalorder %s101, 0
    %s104 = sadd.s32 %s103, 1
    %s105 = scalar_select %p102, %s103, %s104
    %p108 = pneg %p102
    %p109 = scmp.eq.s32.totalorder %s9, 7
    %p110 = por %p108, %p109
    %p111 = scmp.ne.s32.totalorder %s103, %s106
    %p112 = scmp.eq.s32.totalorder %s9, 0
    %p113 = por %p111, %p112
    %p114 = scmp.ne.s32.totalorder %s103, %s106
    %p115 = scmp.eq.s32.totalorder %s14, 7
    %p116 = por %p114, %p115
    %p117 = scmp.ne.s32.totalorder %s106, %s107
    %p118 = scmp.eq.s32.totalorder %s14, 0
    %p119 = por %p117, %p118
    %p120 = scmp.ne.s32.totalorder %s106, %s107
    %p121 = scmp.eq.s32.totalorder %s15, 7
    %p122 = por %p120, %p121
    %p124 = scmp.ne.s32.totalorder %s107, %s123
    %p125 = scmp.eq.s32.totalorder %s15, 0
    %p126 = por %p124, %p125
    %p127 = scmp.le.s32.totalorder 1, %s9
    %p128 = scmp.lt.s32.totalorder %s9, 9
    %p129 = pnand %p127, %p128
    %p130 = pneg %p129
    // Predicated region
    $region9: #{encoder_cnn_forward.1} parent=5 // pred_check
      _
    $region10: #{encoder_cnn_forward.1} parent=5 // pred_check_branch
      %132 = sbr.rel (%p129) target = $region12
    $region11: #{encoder_cnn_forward.1} parent=5 // pred_region
      %s133 = ssub.s32 %s9, 1
      // Predicated region
      $region13: #{encoder_cnn_forward.1} parent=11 // pred_check
        %p134 = pneg %p72
      $region14: #{encoder_cnn_forward.1} parent=11 // pred_check_branch
        %136 = sbr.rel (%p134) target = $region16
      $region15: #{encoder_cnn_forward.1} parent=11 // pred_region
        _
      $region16: #{encoder_cnn_forward.1} parent=11 // pred_fallthru
        _
      // Predicated region
      $region17: #{encoder_cnn_forward.1} parent=11 // pred_check
        %p137 = pneg %p93
      $region18: #{encoder_cnn_forward.1} parent=11 // pred_check_branch
        %139 = sbr.rel (%p137) target = $region20
      $region19: #{encoder_cnn_forward.1} parent=11 // pred_region
        _
      $region20: #{encoder_cnn_forward.1} parent=11 // pred_fallthru
        _
    $region12: #{encoder_cnn_forward.1} parent=5 // pred_fallthru
      _
    %p140 = scmp.lt.s32.totalorder %s9, 8
    // Predicated region
    $region21: #{encoder_cnn_forward.1} parent=5 // pred_check
      %p141 = pneg %p140
    $region22: #{encoder_cnn_forward.1} parent=5 // pred_check_branch
      %143 = sbr.rel (%p141) target = $region24
    $region23: #{encoder_cnn_forward.1} parent=5 // pred_region
      // Predicated region
      $region25: #{encoder_cnn_forward.1} parent=23 // pred_check
        %p144 = pneg %p45
      $region26: #{encoder_cnn_forward.1} parent=23 // pred_check_branch
        %146 = sbr.rel (%p144) target = $region28
      $region27: #{encoder_cnn_forward.1} parent=23 // pred_region
        %s147 = smul.u32 %s16, 4
        %s148 = sadd.s32 %s147, %s17
        %s149 = smul.u32 8, %s148
        %p150 = scmp.lt.s32.totalorder %s149, 63
        %s151 = scalar_select %p150, %s149, 63
        %s152 = smul.addr %s151, 4
        %s153 = scalar_lea.vmem %s0, %s152
        %s154 = smul.u32 %s16, 4
        %s155 = sadd.s32 %s154, %s17
        %s156 = smul.u32 8, %s155
      $region28: #{encoder_cnn_forward.1} parent=23 // pred_fallthru
        _
    $region24: #{encoder_cnn_forward.1} parent=5 // pred_fallthru
      _
    %p157 = scmp.le.s32.totalorder 1, %s9
    %p158 = scmp.lt.s32.totalorder %s9, 9
    %p159 = pnand %p157, %p158
    %p160 = pneg %p159
    // Predicated region
    $region29: #{encoder_cnn_forward.1} parent=5 // pred_check
      _
    $region30: #{encoder_cnn_forward.1} parent=5 // pred_check_branch
      %162 = sbr.rel (%p159) target = $region32
    $region31: #{encoder_cnn_forward.1} parent=5 // pred_region
      %s163 = ssub.s32 %s9, 1
      %s164 = smul.u32 %s18, 4
      %s165 = sadd.s32 %s164, %s19
      %s166 = smul.u32 8, %s165
      %p167 = scmp.lt.s32.totalorder %s166, 63
      %s168 = scalar_select %p167, %s166, 63
      %s169 = smul.addr %s168, 4
      %s170 = scalar_lea.vmem %s0, %s169
      %p171 = pneg %p51
      %p172 = pneg %p48
      %p173 = pneg %p72
      %p174 = pneg %p69
      %p175 = pneg %p93
      %p176 = pneg %p90
      %p177 = pneg %p119
      %p178 = pneg %p116
      %p179 = scmp.lt.s32.totalorder %s18, 1
      %s180 = scalar_select %p179, %s18, 1
      %s181 = scalar_lea.vmem %s3, %s180
      %s182 = smul.u32 %s18, 4
      %s183 = sadd.s32 %s182, %s19
      %s184 = smul.u32 8, %s183
      %p185 = scmp.lt.s32.totalorder %s184, 63
      %s186 = scalar_select %p185, %s184, 63
      %s187 = smul.addr %s186, 4
      %s188 = scalar_lea.vmem %s0, %s187
      %s189 = smul.u32 %s18, 4
      %s190 = sadd.s32 %s189, %s19
      %s191 = smul.u32 8, %s190
      %p192 = scmp.lt.s32.totalorder %s18, 1
      %s193 = scalar_select %p192, %s18, 1
      %s194 = scalar_lea.vmem %s3, %s193
      %p196 = scmp.eq.s32.totalorder %s19, 0
      // Predicated region
      $region33: #{encoder_cnn_forward.1} parent=31 // pred_check
        %p197 = pneg %p196
      $region34: #{encoder_cnn_forward.1} parent=31 // pred_check_branch
        %199 = sbr.rel (%p197) target = $region36
      $region35: #{encoder_cnn_forward.1} parent=31 // pred_region
        %200 = vst [vmem:[#allocation2] sm:$0xff] 0.0
      $region36: #{encoder_cnn_forward.1} parent=31 // pred_fallthru
        _
      %v201 = vld [vmem:[%s188] sm:$0xf]
      %v202 = vld [vmem:[%s188 + $0x4] sm:$0xf]
      %v203 = vld [vmem:[%s188 + $0x8] sm:$0xf]
      %v204 = vld [vmem:[%s188 + $0xc] sm:$0xf]
      %v205 = vld [vmem:[%s188 + $0x10] sm:$0xf]
      %v206 = vld [vmem:[%s188 + $0x14] sm:$0xf]
      %v207 = vld [vmem:[%s188 + $0x18] sm:$0xf]
      %v208 = vld [vmem:[%s188 + $0x1c] sm:$0xf]
      %v209 = vld [vmem:[%s1] sm:$0xf]
      %v210 = vld [vmem:[%s1 + $0x4] sm:$0xf]
      %v211 = vld [vmem:[%s1 + $0x8] sm:$0xf]
      %v212 = vld [vmem:[%s1 + $0xc] sm:$0x3]
      %v213 = vld [vmem:[%s2] sm:$0x1]
      %v215 = vlaneseq
      %v216 = vshrl.u32 %v215, 7
      %v217 = vsub.s32 0, %v216
      %v218 = vrot.slane %v213, %v217
      %v228 = vunpack.c.l.b16 %v201
      %v229 = vunpack.c.l.b16 %v202
      %v230 = vunpack.c.l.b16 %v203
      %v231 = vunpack.c.l.b16 %v204
      %v232 = vunpack.c.l.b16 %v205
      %v233 = vunpack.c.l.b16 %v206
      %v234 = vunpack.c.l.b16 %v207
      %v235 = vunpack.c.l.b16 %v208
      %v236 = vpack.c.b16 %v229, %v228
      %v237 = vpack.c.b16 %v231, %v230
      %v238 = vpack.c.b16 %v233, %v232
      %v239 = vpack.c.b16 %v235, %v234
      %v244 = vunpack.c.l.b16 %v209
      %v245 = vunpack.c.l.b16 %v210
      %v246 = vunpack.c.l.b16 %v211
      %v247 = vunpack.c.l.b16 %v212
      %v248 = vpack.c.b16 %v245, %v244
      %v249 = vpack.c.b16 %v247, %v246
      %vm251 = vcmask 220160
      %v253 = vsel %vm251, %v236, 0
      %v256 = vsel %vm251, %v237, 0
      %v259 = vsel %vm251, %v238, 0
      %v262 = vsel %vm251, %v239, 0
      %vm264 = vcmask 1044480
      %vm265 = vcmask 1045504
      %v266 = vsel %vm264, 4294967295, 65535
      %v267 = vsel %vm265, %v266, 0
      %v269 = vand.u32 %v249, %v267
      %271 = vmatprep.subr.bf16.mxu0 0
      %272 = vmatpush1.bf16.msra.mxu0 %v248
      %273 = vmatprep.subr.bf16.mxu0 0
      %274 = vmatpush1.bf16.msra.mxu0 %v269
      %275 = vmatprep.subr.bf16.mxu0 0
      %276 = vmatpush1.bf16.msra.mxu0 0
      %277 = vmatprep.subr.bf16.mxu0 0
      %278 = vmatpush1.bf16.msra.mxu0 0
      %279 = vmatprep.subr.bf16.mxu0 0
      %280 = vmatpush1.bf16.msra.mxu0 0
      %281 = vmatprep.subr.bf16.mxu0 0
      %282 = vmatpush1.bf16.msra.mxu0 0
      %283 = vmatprep.subr.bf16.mxu0 0
      %284 = vmatpush1.bf16.msra.mxu0 0
      %285 = vmatprep.subr.bf16.mxu0 0
      %286 = vmatpush1.bf16.msra.mxu0 0
      %287 = vmatprep.subr.bf16.mxu0 0
      %288 = vmatpush1.bf16.msra.mxu0 0
      %289 = vmatprep.subr.bf16.mxu0 0
      %290 = vmatpush1.bf16.msra.mxu0 0
      %291 = vmatprep.subr.bf16.mxu0 0
      %292 = vmatpush1.bf16.msra.mxu0 0
      %293 = vmatprep.subr.bf16.mxu0 0
      %294 = vmatpush1.bf16.msra.mxu0 0
      %295 = vmatprep.subr.bf16.mxu0 0
      %296 = vmatpush1.bf16.msra.mxu0 0
      %297 = vmatprep.subr.bf16.mxu0 0
      %298 = vmatpush1.bf16.msra.mxu0 0
      %299 = vmatprep.subr.bf16.mxu0 0
      %300 = vmatpush1.bf16.msra.mxu0 0
      %301 = vmatprep.subr.bf16.mxu0 0
      %302 = vmatpush1.bf16.msra.mxu0 0
      %303 = vmatprep.mubr.bf16.mxu0 0
      %304 = vmatmul.mubr.bf16.gmra.mrb[0].mxu0 %v253
      %v305 = vpop.f32.mrb[0].mxu0
      %v306 = vadd.f32 %v218, %v305
      %v307 = vpop.f32.mrb[0].mxu0
      %v308 = vpop.f32.mrb[0].mxu0
      %v309 = vadd.f32 %v218, %v308
      %v310 = vpop.f32.mrb[0].mxu0
      %311 = vmatprep.mubr.bf16.mxu0 0
      %312 = vmatmul.mubr.bf16.gmra.mrb[0].mxu0 %v256
      %v313 = vpop.f32.mrb[0].mxu0
      %v314 = vadd.f32 %v218, %v313
      %v315 = vpop.f32.mrb[0].mxu0
      %v316 = vpop.f32.mrb[0].mxu0
      %v317 = vadd.f32 %v218, %v316
      %v318 = vpop.f32.mrb[0].mxu0
      %319 = vmatprep.mubr.bf16.mxu0 0
      %320 = vmatmul.mubr.bf16.gmra.mrb[0].mxu0 %v259
      %v321 = vpop.f32.mrb[0].mxu0
      %v322 = vadd.f32 %v218, %v321
      %v323 = vpop.f32.mrb[0].mxu0
      %v324 = vpop.f32.mrb[0].mxu0
      %v325 = vadd.f32 %v218, %v324
      %v326 = vpop.f32.mrb[0].mxu0
      %327 = vmatprep.mubr.bf16.mxu0 0
      %328 = vmatmul.mubr.bf16.gmra.mrb[0].mxu0 %v262
      %v329 = vpop.f32.mrb[0].mxu0
      %v330 = vadd.f32 %v218, %v329
      %v331 = vpop.f32.mrb[0].mxu0
      %v332 = vpop.f32.mrb[0].mxu0
      %v333 = vadd.f32 %v218, %v332
      %v334 = vpop.f32.mrb[0].mxu0
      %335 = vdwg.mxu0
      %v336 = vmax.f32 %v306, 0.0
      %v337 = vmax.f32 %v309, 0.0
      %v338 = vmax.f32 %v314, 0.0
      %v339 = vmax.f32 %v317, 0.0
      %v340 = vmax.f32 %v322, 0.0
      %v341 = vmax.f32 %v325, 0.0
      %v342 = vmax.f32 %v330, 0.0
      %v343 = vmax.f32 %v333, 0.0
      %v344 = vld [vmem:[#allocation2] sm:$0xff]
      %v345 = vadd.f32 %v336, %v337
      %v346 = vadd.f32 %v345, %v338
      %v347 = vadd.f32 %v346, %v339
      %v348 = vadd.f32 %v347, %v340
      %v349 = vadd.f32 %v348, %v341
      %v350 = vadd.f32 %v349, %v342
      %v351 = vadd.f32 %v350, %v343
      %v352 = vadd.f32 %v344, %v351
      %353 = vst [vmem:[#allocation2] sm:$0xff] %v352
      %p354 = scmp.eq.s32.totalorder %s19, 3
      // Predicated region
      $region37: #{encoder_cnn_forward.1} parent=31 // pred_check
        %p355 = pneg %p354
      $region38: #{encoder_cnn_forward.1} parent=31 // pred_check_branch
        %357 = sbr.rel (%p355) target = $region40
      $region39: #{encoder_cnn_forward.1} parent=31 // pred_region
        %v358 = vld [vmem:[#allocation2] sm:$0xff]
        %v359 = vrot.slane %v358, 4
        %v360 = vadd.f32 %v358, %v359
        %v361 = vrot.slane %v360, 2
        %v362 = vadd.f32 %v360, %v361
        %v363 = vrot.slane %v362, 1
        %v364 = vadd.f32 %v362, %v363
        %v365 = vmul.f32 %v364, 0.00390625
        %366 = vst [vmem:[%s194] sm:$0x1] %v365
      $region40: #{encoder_cnn_forward.1} parent=31 // pred_fallthru
        _
      %p367 = scmp.lt.s32.totalorder %s18, 1
      %s368 = scalar_select %p367, %s18, 1
      %s369 = scalar_lea.vmem %s3, %s368
      // Predicated region
      $region41: #{encoder_cnn_forward.1} parent=31 // pred_check
        %p370 = pneg %p116
      $region42: #{encoder_cnn_forward.1} parent=31 // pred_check_branch
        %372 = sbr.rel (%p370) target = $region44
      $region43: #{encoder_cnn_forward.1} parent=31 // pred_region
        _
      $region44: #{encoder_cnn_forward.1} parent=31 // pred_fallthru
        _
    $region32: #{encoder_cnn_forward.1} parent=5 // pred_fallthru
      _
    %p373 = scmp.le.s32.totalorder 2, %s9
    // Predicated region
    $region45: #{encoder_cnn_forward.1} parent=5 // pred_check
      %p374 = pneg %p373
    $region46: #{encoder_cnn_forward.1} parent=5 // pred_check_branch
      %376 = sbr.rel (%p374) target = $region48
    $region47: #{encoder_cnn_forward.1} parent=5 // pred_region
      %s377 = ssub.s32 %s9, 2
      // Predicated region
      $region49: #{encoder_cnn_forward.1} parent=47 // pred_check
        %p378 = pneg %p122
      $region50: #{encoder_cnn_forward.1} parent=47 // pred_check_branch
        %380 = sbr.rel (%p378) target = $region52
      $region51: #{encoder_cnn_forward.1} parent=47 // pred_region
        %p381 = scmp.lt.s32.totalorder %s20, 1
        %s382 = scalar_select %p381, %s20, 1
        %s383 = scalar_lea.vmem %s3, %s382
      $region52: #{encoder_cnn_forward.1} parent=47 // pred_fallthru
        _
    $region48: #{encoder_cnn_forward.1} parent=5 // pred_fallthru
      _
  $region6: #{encoder_cnn_forward.1} parent=0 // loop_footer
    %s13 = sadd.s32 1, %s9
  $region7: #{encoder_cnn_forward.1} parent=0 // loop_footer_branch
    %8 = sbr.rel target = $region3
  $region8: #{encoder_cnn_forward.1} parent=0 // loop_exit
    _

</llo_original>
